<compile_context>
chip_gen: v7x
topology: tpu7x:2x2x1
jax: 0.10.0
libtpu: 0.0.40
codegen_flags: <defaults>
</compile_context>

<pallas_src>
import functools

import jax
import jax.numpy as jnp
from jax import lax
from jax.experimental import pallas as pl
from jax.experimental.pallas import tpu as pltpu


def _sigmoid_f32(z):
    # Single EUP transcendental (tanh); the scale/shift go to the VALUs.
    return 0.5 * jnp.tanh(0.5 * z) + 0.5


def mlp_kernel(x_ref, w1t_ref, b1_ref, w2t_ref, b2_ref, w3t_ref, b3_ref, o_ref):
    x = x_ref[...]                                                   # (TM, 30) f32

    # Layer 1: contract the feature dims of W1^T (64, 30) and x (TM, 30)
    # -> feature-major (64, TM), no transpose needed.
    z1 = lax.dot_general(
        w1t_ref[...], x, (((1,), (1,)), ((), ())),
        preferred_element_type=jnp.float32) + b1_ref[...]
    h1 = _sigmoid_f32(z1)                                            # (64, TM)

    z2 = jnp.dot(w2t_ref[...], h1,
                 preferred_element_type=jnp.float32) + b2_ref[...]
    h2 = _sigmoid_f32(z2)                                            # (32, TM)

    z3 = jnp.dot(w3t_ref[...], h2,
                 preferred_element_type=jnp.float32) + b3_ref[...]   # (1, TM)
    o_ref[...] = _sigmoid_f32(z3).astype(o_ref.dtype)                # lane-dense store


@functools.partial(jax.jit, static_argnames=("tile_m",))
def net_forward(x, params, *, tile_m=4096):
    """x: (B, 30) f32. params: w1,b1,w2,b2,w3,b3 with PyTorch nn.Linear semantics
    (weights stored (in_features, out_features)). Returns (B, 1) f32."""
    w1, b1 = params["w1"], params["b1"]
    w2, b2 = params["w2"], params["b2"]
    w3, b3 = params["w3"], params["b3"]
    B, D = x.shape

    # Batch tile: whole (sublane-padded) batch when small, otherwise tile_m rows.
    # tile_m=4096 amortizes the ~0.35 us/step grid overhead while keeping VMEM use
    # (~4-5 MiB incl. double-buffered input + f32 intermediates) inside every gen's
    # default scoped VMEM limit, including v5e's 16 MiB.
    if B <= tile_m:
        tm = max(8, -(-B // 8) * 8)
    else:
        tm = tile_m
    b_pad = -(-B // tm) * tm
    if b_pad != B:
        x = jnp.pad(x, ((0, b_pad - B), (0, 0)))
    n_tiles = b_pad // tm

    # Weights pre-transposed to (out, in); biases as (out, 1) columns that broadcast
    # over the lane (batch) dim.  All f32.
    w1t = w1.T                     # (64, 30)
    w2t = w2.T                     # (32, 64)
    w3t = w3.T                     # (1, 32)
    b1c = b1.reshape(-1, 1)        # (64, 1)
    b2c = b2.reshape(-1, 1)        # (32, 1)
    b3c = b3.reshape(-1, 1)        # (1, 1)

    # Constant index_map -> DMA'd once, VMEM-resident across all batch tiles.
    resident = lambda a: pl.BlockSpec(a.shape, lambda i: (0, 0))

    out_row = pl.pallas_call(
        mlp_kernel,
        out_shape=jax.ShapeDtypeStruct((1, b_pad), jnp.float32),
        grid_spec=pltpu.PrefetchScalarGridSpec(
            num_scalar_prefetch=0,
            grid=(n_tiles,),
            in_specs=[
                pl.BlockSpec((tm, D), lambda i: (i, 0)),     # x: tiled along batch
                resident(w1t), resident(b1c),
                resident(w2t), resident(b2c),
                resident(w3t), resident(b3c),
            ],
            out_specs=pl.BlockSpec((1, tm), lambda i: (0, i)),   # lane-dense row slab
        ),
        compiler_params=pltpu.CompilerParams(
            # Batch tiles are independent; "parallel" lets megacore shard them on v7x.
            dimension_semantics=("parallel",),
        ),
    )(x, w1t, b1c, w2t, b2c, w3t, b3c)

    # (1, B_pad) lane-dense slab -> (B, 1), matching the PyTorch module output.
    return out_row.reshape(b_pad, 1)[:B]


def init_params(key):
    """Deterministic PyTorch-style (uniform +/- 1/sqrt(fan_in)) initialization."""
    dims = [(30, 64), (64, 32), (32, 1)]
    params = {}
    for i, (fan_in, fan_out) in enumerate(dims, start=1):
        key, kw, kb = jax.random.split(key, 3)
        bound = 1.0 / jnp.sqrt(fan_in)
        params[f"w{i}"] = jax.random.uniform(
            kw, (fan_in, fan_out), jnp.float32, -bound, bound
        )
        params[f"b{i}"] = jax.random.uniform(
            kb, (1, fan_out), jnp.float32, -bound, bound
        )
    return params


if __name__ == "__main__":
    key = jax.random.PRNGKey(0)
    key, kx1, kx2 = jax.random.split(key, 3)
    params = init_params(key)

    # Pure-f32 reference (same math as the PyTorch module).
    def ref_f32(x, p):
        h = jax.nn.sigmoid(x @ p["w1"] + p["b1"])
        h = jax.nn.sigmoid(h @ p["w2"] + p["b2"])
        return jax.nn.sigmoid(h @ p["w3"] + p["b3"])

    # Small batch (single tile). Launch-overhead-bound at this size (see NOTE above).
    x_small = jax.random.normal(kx1, (8, 30), jnp.float32)
    out_small = jax.block_until_ready(net_forward(x_small, params))
    assert out_small.shape == (8, 1)
    assert jnp.allclose(out_small, ref_f32(x_small, params), atol=1e-5), \
        "small batch: f32-ref mismatch"

    # Larger batch: exercises the batch tiling / padding path.
    x_large = jax.random.normal(kx2, (1024, 30), jnp.float32)
    out_large = jax.block_until_ready(net_forward(x_large, params))
    assert out_large.shape == (1024, 1)
    assert jnp.allclose(out_large, ref_f32(x_large, params), atol=1e-5), \
        "large batch: f32-ref mismatch"

    print("KERNEL_OK")
</pallas_src>

<mosaic_0001>
module attributes {stable_mosaic.version = 11 : i64} {
  func.func @mlp_kernel(%arg0: i32, %arg1: memref<8x30xf32, #tpu.memory_space<vmem>>, %arg2: memref<64x30xf32, #tpu.memory_space<vmem>>, %arg3: memref<64x1xf32, #tpu.memory_space<vmem>>, %arg4: memref<32x64xf32, #tpu.memory_space<vmem>>, %arg5: memref<32x1xf32, #tpu.memory_space<vmem>>, %arg6: memref<1x32xf32, #tpu.memory_space<vmem>>, %arg7: memref<1x1xf32, #tpu.memory_space<vmem>>, %arg8: memref<1x8xf32, #tpu.memory_space<vmem>>) attributes {dimension_semantics = [#tpu.dimension_semantics<parallel>], iteration_bounds = array<i64: 1>, scalar_prefetch = 0 : i64, scratch_operands = 0 : i64, tpu.core_type = #tpu.core_type<tc>, window_params = [{transform_indices = @transform_0, window_bounds = array<i64: 8, 30>}, {pipeline_mode = #tpu.pipeline_mode<synchronous>, transform_indices = @transform_1, window_bounds = array<i64: 64, 30>}, {pipeline_mode = #tpu.pipeline_mode<synchronous>, transform_indices = @transform_2, window_bounds = array<i64: 64, 1>}, {pipeline_mode = #tpu.pipeline_mode<synchronous>, transform_indices = @transform_3, window_bounds = array<i64: 32, 64>}, {pipeline_mode = #tpu.pipeline_mode<synchronous>, transform_indices = @transform_4, window_bounds = array<i64: 32, 1>}, {pipeline_mode = #tpu.pipeline_mode<synchronous>, transform_indices = @transform_5, window_bounds = array<i64: 1, 32>}, {pipeline_mode = #tpu.pipeline_mode<synchronous>, transform_indices = @transform_6, window_bounds = array<i64: 1, 1>}, {transform_indices = @transform_7, window_bounds = array<i64: 1, 8>}]} {
    %c0 = arith.constant 0 : index
    %c0_0 = arith.constant 0 : index
    %0 = vector.load %arg1[%c0, %c0_0] : memref<8x30xf32, #tpu.memory_space<vmem>>, vector<8x30xf32>
    %c0_1 = arith.constant 0 : index
    %c0_2 = arith.constant 0 : index
    %1 = vector.load %arg2[%c0_1, %c0_2] : memref<64x30xf32, #tpu.memory_space<vmem>>, vector<64x30xf32>
    %cst = arith.constant dense<0.000000e+00> : vector<64x8xf32>
    %2 = tpu.matmul %1, %0, %cst {dimension_numbers = #tpu.dot_dimension_numbers<[1], [1], [0], [0], [0, 0, 1, 0], [], []>} : vector<64x30xf32>, vector<8x30xf32>, vector<64x8xf32> -> vector<64x8xf32>
    %c0_3 = arith.constant 0 : index
    %c0_4 = arith.constant 0 : index
    %3 = vector.load %arg3[%c0_3, %c0_4] : memref<64x1xf32, #tpu.memory_space<vmem>>, vector<64x1xf32>
    %4 = vector.broadcast %3 : vector<64x1xf32> to vector<64x8xf32>
    %5 = arith.addf %2, %4 : vector<64x8xf32>
    %cst_5 = arith.constant 5.000000e-01 : f32
    %6 = vector.broadcast %cst_5 : f32 to vector<64x8xf32>
    %7 = arith.mulf %6, %5 : vector<64x8xf32>
    %8 = math.tanh %7 : vector<64x8xf32>
    %cst_6 = arith.constant 5.000000e-01 : f32
    %9 = vector.broadcast %cst_6 : f32 to vector<64x8xf32>
    %10 = arith.mulf %9, %8 : vector<64x8xf32>
    %cst_7 = arith.constant 5.000000e-01 : f32
    %11 = vector.broadcast %cst_7 : f32 to vector<64x8xf32>
    %12 = arith.addf %10, %11 : vector<64x8xf32>
    %c0_8 = arith.constant 0 : index
    %c0_9 = arith.constant 0 : index
    %13 = vector.load %arg4[%c0_8, %c0_9] : memref<32x64xf32, #tpu.memory_space<vmem>>, vector<32x64xf32>
    %cst_10 = arith.constant dense<0.000000e+00> : vector<32x8xf32>
    %14 = tpu.matmul %13, %12, %cst_10 {dimension_numbers = #tpu.dot_dimension_numbers<[1], [0], [0], [1], [0, 0, 1, 1], [], []>} : vector<32x64xf32>, vector<64x8xf32>, vector<32x8xf32> -> vector<32x8xf32>
    %c0_11 = arith.constant 0 : index
    %c0_12 = arith.constant 0 : index
    %15 = vector.load %arg5[%c0_11, %c0_12] : memref<32x1xf32, #tpu.memory_space<vmem>>, vector<32x1xf32>
    %16 = vector.broadcast %15 : vector<32x1xf32> to vector<32x8xf32>
    %17 = arith.addf %14, %16 : vector<32x8xf32>
    %cst_13 = arith.constant 5.000000e-01 : f32
    %18 = vector.broadcast %cst_13 : f32 to vector<32x8xf32>
    %19 = arith.mulf %18, %17 : vector<32x8xf32>
    %20 = math.tanh %19 : vector<32x8xf32>
    %cst_14 = arith.constant 5.000000e-01 : f32
    %21 = vector.broadcast %cst_14 : f32 to vector<32x8xf32>
    %22 = arith.mulf %21, %20 : vector<32x8xf32>
    %cst_15 = arith.constant 5.000000e-01 : f32
    %23 = vector.broadcast %cst_15 : f32 to vector<32x8xf32>
    %24 = arith.addf %22, %23 : vector<32x8xf32>
    %c0_16 = arith.constant 0 : index
    %c0_17 = arith.constant 0 : index
    %25 = vector.load %arg6[%c0_16, %c0_17] : memref<1x32xf32, #tpu.memory_space<vmem>>, vector<1x32xf32>
    %cst_18 = arith.constant dense<0.000000e+00> : vector<1x8xf32>
    %26 = tpu.matmul %25, %24, %cst_18 {dimension_numbers = #tpu.dot_dimension_numbers<[1], [0], [0], [1], [0, 0, 1, 1], [], []>} : vector<1x32xf32>, vector<32x8xf32>, vector<1x8xf32> -> vector<1x8xf32>
    %c0_19 = arith.constant 0 : index
    %c0_20 = arith.constant 0 : index
    %27 = vector.load %arg7[%c0_19, %c0_20] : memref<1x1xf32, #tpu.memory_space<vmem>>, vector<1x1xf32>
    %28 = vector.broadcast %27 : vector<1x1xf32> to vector<1x8xf32>
    %29 = arith.addf %26, %28 : vector<1x8xf32>
    %cst_21 = arith.constant 5.000000e-01 : f32
    %30 = vector.broadcast %cst_21 : f32 to vector<1x8xf32>
    %31 = arith.mulf %30, %29 : vector<1x8xf32>
    %32 = math.tanh %31 : vector<1x8xf32>
    %cst_22 = arith.constant 5.000000e-01 : f32
    %33 = vector.broadcast %cst_22 : f32 to vector<1x8xf32>
    %34 = arith.mulf %33, %32 : vector<1x8xf32>
    %cst_23 = arith.constant 5.000000e-01 : f32
    %35 = vector.broadcast %cst_23 : f32 to vector<1x8xf32>
    %36 = arith.addf %34, %35 : vector<1x8xf32>
    %c0_24 = arith.constant 0 : index
    %c0_25 = arith.constant 0 : index
    %37 = vector.load %arg8[%c0_24, %c0_25] : memref<1x8xf32, #tpu.memory_space<vmem>>, vector<1x8xf32>
    tpu.vector_store %arg8[%c0_24, %c0_25], %36 {strides = array<i32>} : memref<1x8xf32, #tpu.memory_space<vmem>>, vector<1x8xf32>,
    return
  }
  func.func @transform_0(%arg0: i32) -> (i32, i32) {
    %c0_i32 = arith.constant 0 : i32
    %c0_i32_0 = arith.constant 0 : i32
    return %arg0, %c0_i32 : i32, i32
  }
  func.func @transform_1(%arg0: i32) -> (i32, i32) {
    %c0_i32 = arith.constant 0 : i32
    %c0_i32_0 = arith.constant 0 : i32
    %c0_i32_1 = arith.constant 0 : i32
    return %c0_i32, %c0_i32_0 : i32, i32
  }
  func.func @transform_2(%arg0: i32) -> (i32, i32) {
    %c0_i32 = arith.constant 0 : i32
    %c0_i32_0 = arith.constant 0 : i32
    %c0_i32_1 = arith.constant 0 : i32
    return %c0_i32, %c0_i32_0 : i32, i32
  }
  func.func @transform_3(%arg0: i32) -> (i32, i32) {
    %c0_i32 = arith.constant 0 : i32
    %c0_i32_0 = arith.constant 0 : i32
    %c0_i32_1 = arith.constant 0 : i32
    return %c0_i32, %c0_i32_0 : i32, i32
  }
  func.func @transform_4(%arg0: i32) -> (i32, i32) {
    %c0_i32 = arith.constant 0 : i32
    %c0_i32_0 = arith.constant 0 : i32
    %c0_i32_1 = arith.constant 0 : i32
    return %c0_i32, %c0_i32_0 : i32, i32
  }
  func.func @transform_5(%arg0: i32) -> (i32, i32) {
    %c0_i32 = arith.constant 0 : i32
    %c0_i32_0 = arith.constant 0 : i32
    %c0_i32_1 = arith.constant 0 : i32
    return %c0_i32, %c0_i32_0 : i32, i32
  }
  func.func @transform_6(%arg0: i32) -> (i32, i32) {
    %c0_i32 = arith.constant 0 : i32
    %c0_i32_0 = arith.constant 0 : i32
    %c0_i32_1 = arith.constant 0 : i32
    return %c0_i32, %c0_i32_0 : i32, i32
  }
  func.func @transform_7(%arg0: i32) -> (i32, i32) {
    %c0_i32 = arith.constant 0 : i32
    %c0_i32_0 = arith.constant 0 : i32
    return %c0_i32, %arg0 : i32, i32
  }
}

</mosaic_0001>

<llo_original>
// kernel: net_forward.1
$region0: #{net_forward.1}
  #allocation0 [shape = 'u32[]', space=smem, size = 0x4, offset = 0x4, fixed_abs, tag = 'smem constant byte address 0x4 - core index']
  #allocation1 [shape = 'u32[144,128]{1,0:T(1,128)}', space=vmem, size = 0x12000, scoped, tag = 'internal scratch']
  #allocation2 [shape = 'f32[1,1]{1,0:T(1,128)S(1)}', space=vmem, size = 0x200, scoped, tag = 'scoped memory for net_forward.1']
  %s0 = inlined_call_operand.vmem [shape: f32[8,30], index: 0, kind: input, shape index: {}]
  %s1 = inlined_call_operand.vmem [shape: f32[64,30], index: 1, kind: input, shape index: {}]
  %s2 = inlined_call_operand.vmem [shape: f32[64,1], index: 2, kind: input, shape index: {}]
  %s3 = inlined_call_operand.vmem [shape: f32[32,64], index: 3, kind: input, shape index: {}]
  %s4 = inlined_call_operand.vmem [shape: f32[32,1], index: 4, kind: input, shape index: {}]
  %s5 = inlined_call_operand.vmem [shape: f32[1,32], index: 5, kind: input, shape index: {}]
  %s6 = inlined_call_operand.<no memory space> [shape: f32[1,1], index: 6, kind: input, shape index: {}]
  %s7 = inlined_call_operand.hbm [shape: f32[1,8], index: 7, kind: output, shape index: {}]
  %s8 = sld [smem:[#allocation0]]
  $region38: #{net_forward.1} parent=0
    _
  %s10 = ssub.s32 1, %s8
  %s11 = scalar_select 0, %s10, %s8
  %v12 = vstv %s6
  %13 = vst [vmem:[#allocation2] sm:$0x1] %v12
  $region1: #{net_forward.1} parent=0
    #allocation3 [shape = 'u8[512]{0}', space=vmem, size = 0x400, scoped, tag = 'output window, operand 0, single buffered']
    #allocation4 [shape = 's32[1]{0}', space=sflag, size = 0x4, scoped, tag = 'scoped memory for net_forward.1']
    %14 = vsyncpa [#allocation4], 0
    // Predicated region
    $region2: #{net_forward.1} parent=1 // pred_check
      _
    $region3: #{net_forward.1} parent=1 // pred_check_branch
      %16 = sbr.rel (0) target = $region5
    $region4: #{net_forward.1} parent=1 // pred_region
      _
    $region5: #{net_forward.1} parent=1 // pred_fallthru
      _
    // Predicated region
    $region6: #{net_forward.1} parent=1 // pred_check
      _
    $region7: #{net_forward.1} parent=1 // pred_check_branch
      %18 = sbr.rel (0) target = $region9
    $region8: #{net_forward.1} parent=1 // pred_region
      _
    $region9: #{net_forward.1} parent=1 // pred_fallthru
      _
    // Predicated region
    $region10: #{net_forward.1} parent=1 // pred_check
      _
    $region11: #{net_forward.1} parent=1 // pred_check_branch
      %20 = sbr.rel (0) target = $region13
    $region12: #{net_forward.1} parent=1 // pred_region
      _
    $region13: #{net_forward.1} parent=1 // pred_fallthru
      _
    // Predicated region
    $region14: #{net_forward.1} parent=1 // pred_check
      _
    $region15: #{net_forward.1} parent=1 // pred_check_branch
      %22 = sbr.rel (0) target = $region17
    $region16: #{net_forward.1} parent=1 // pred_region
      _
    $region17: #{net_forward.1} parent=1 // pred_fallthru
      _
    // Predicated region
    $region18: #{net_forward.1} parent=1 // pred_check
      _
    $region19: #{net_forward.1} parent=1 // pred_check_branch
      %24 = sbr.rel (0) target = $region21
    $region20: #{net_forward.1} parent=1 // pred_region
      _
    $region21: #{net_forward.1} parent=1 // pred_fallthru
      _
    // Predicated region
    $region22: #{net_forward.1} parent=1 // pred_check
      _
    $region23: #{net_forward.1} parent=1 // pred_check_branch
      %26 = sbr.rel (0) target = $region25
    $region24: #{net_forward.1} parent=1 // pred_region
      _
    $region25: #{net_forward.1} parent=1 // pred_fallthru
      _
    // Predicated region
    $region26: #{net_forward.1} parent=1 // pred_check
      _
    $region27: #{net_forward.1} parent=1 // pred_check_branch
      %28 = sbr.rel (0) target = $region29
    $region28: #{net_forward.1} parent=1 // pred_region
      _
    $region29: #{net_forward.1} parent=1 // pred_fallthru
      _
    %v29 = vld [vmem:[%s0] sm:$0xff]
    %v30 = vld [vmem:[%s1] sm:$0xff]
    %v31 = vld [vmem:[%s1 + $0x8] sm:$0xff]
    %v32 = vld [vmem:[%s1 + $0x10] sm:$0xff]
    %v33 = vld [vmem:[%s1 + $0x18] sm:$0xff]
    %v34 = vld [vmem:[%s1 + $0x20] sm:$0xff]
    %v35 = vld [vmem:[%s1 + $0x28] sm:$0xff]
    %v36 = vld [vmem:[%s1 + $0x30] sm:$0xff]
    %v37 = vld [vmem:[%s1 + $0x38] sm:$0xff]
    %v38 = vld [vmem:[%s2] sm:$0xff]
    %v39 = vld [vmem:[%s2 + $0x8] sm:$0xff]
    %v40 = vld [vmem:[%s2 + $0x10] sm:$0xff]
    %v41 = vld [vmem:[%s2 + $0x18] sm:$0xff]
    %v42 = vld [vmem:[%s2 + $0x20] sm:$0xff]
    %v43 = vld [vmem:[%s2 + $0x28] sm:$0xff]
    %v44 = vld [vmem:[%s2 + $0x30] sm:$0xff]
    %v45 = vld [vmem:[%s2 + $0x38] sm:$0xff]
    %47 = vset.pattern.permute.xlu0 0
    %48 = vperm.xlu0 %47, %v38
    %v49 = vpop.permute.xlu0 %48
    %52 = vset.pattern.permute.xlu0 0
    %53 = vperm.xlu0 %52, %v39
    %v54 = vpop.permute.xlu0 %53
    %57 = vset.pattern.permute.xlu0 0
    %58 = vperm.xlu0 %57, %v40
    %v59 = vpop.permute.xlu0 %58
    %62 = vset.pattern.permute.xlu0 0
    %63 = vperm.xlu0 %62, %v41
    %v64 = vpop.permute.xlu0 %63
    %67 = vset.pattern.permute.xlu0 0
    %68 = vperm.xlu0 %67, %v42
    %v69 = vpop.permute.xlu0 %68
    %72 = vset.pattern.permute.xlu0 0
    %73 = vperm.xlu0 %72, %v43
    %v74 = vpop.permute.xlu0 %73
    %77 = vset.pattern.permute.xlu0 0
    %78 = vperm.xlu0 %77, %v44
    %v79 = vpop.permute.xlu0 %78
    %82 = vset.pattern.permute.xlu0 0
    %83 = vperm.xlu0 %82, %v45
    %v84 = vpop.permute.xlu0 %83
    %vm86 = vcmask 244736
    %v88 = vsel %vm86, %v30, 0
    %v91 = vsel %vm86, %v31, 0
    %v94 = vsel %vm86, %v32, 0
    %v97 = vsel %vm86, %v33, 0
    %v100 = vsel %vm86, %v34, 0
    %v103 = vsel %vm86, %v35, 0
    %v106 = vsel %vm86, %v36, 0
    %v109 = vsel %vm86, %v37, 0
    %v112 = vsel %vm86, %v29, 0
    %114 = vmatprep.subr.mxu0 0.0
    %115 = vmatpush1.xpose.msra.mxu0 %v112
    %116 = vmatprep.subr.mxu0 0.0
    %117 = vmatpush1.xpose.msra.mxu0 0.0
    %118 = vmatprep.subr.mxu0 0.0
    %119 = vmatpush1.xpose.msra.mxu0 0.0
    %120 = vmatprep.subr.mxu0 0.0
    %121 = vmatpush1.xpose.msra.mxu0 0.0
    %122 = vmatprep.subr.mxu0 0.0
    %123 = vmatpush1.xpose.msra.mxu0 0.0
    %124 = vmatprep.subr.mxu0 0.0
    %125 = vmatpush1.xpose.msra.mxu0 0.0
    %126 = vmatprep.subr.mxu0 0.0
    %127 = vmatpush1.xpose.msra.mxu0 0.0
    %128 = vmatprep.subr.mxu0 0.0
    %129 = vmatpush1.xpose.msra.mxu0 0.0
    %130 = vmatprep.subr.mxu0 0.0
    %131 = vmatpush1.xpose.msra.mxu0 0.0
    %132 = vmatprep.subr.mxu0 0.0
    %133 = vmatpush1.xpose.msra.mxu0 0.0
    %134 = vmatprep.subr.mxu0 0.0
    %135 = vmatpush1.xpose.msra.mxu0 0.0
    %136 = vmatprep.subr.mxu0 0.0
    %137 = vmatpush1.xpose.msra.mxu0 0.0
    %138 = vmatprep.subr.mxu0 0.0
    %139 = vmatpush1.xpose.msra.mxu0 0.0
    %140 = vmatprep.subr.mxu0 0.0
    %141 = vmatpush1.xpose.msra.mxu0 0.0
    %142 = vmatprep.subr.mxu0 0.0
    %143 = vmatpush1.xpose.msra.mxu0 0.0
    %144 = vmatprep.subr.mxu0 0.0
    %145 = vmatpush1.xpose.msra.mxu0 0.0
    %146 = vmatprep.subr.mxu0 0.0
    %147 = vmatpush1.xpose.msra.mxu0 0.0
    %148 = vmatprep.subr.mxu0 0.0
    %149 = vmatpush1.xpose.msra.mxu0 0.0
    %150 = vmatprep.subr.mxu0 0.0
    %151 = vmatpush1.xpose.msra.mxu0 0.0
    %152 = vmatprep.subr.mxu0 0.0
    %153 = vmatpush1.xpose.msra.mxu0 0.0
    %154 = vmatprep.subr.mxu0 0.0
    %155 = vmatpush1.xpose.msra.mxu0 0.0
    %156 = vmatprep.subr.mxu0 0.0
    %157 = vmatpush1.xpose.msra.mxu0 0.0
    %158 = vmatprep.subr.mxu0 0.0
    %159 = vmatpush1.xpose.msra.mxu0 0.0
    %160 = vmatprep.subr.mxu0 0.0
    %161 = vmatpush1.xpose.msra.mxu0 0.0
    %162 = vmatprep.subr.mxu0 0.0
    %163 = vmatpush1.xpose.msra.mxu0 0.0
    %164 = vmatprep.subr.mxu0 0.0
    %165 = vmatpush1.xpose.msra.mxu0 0.0
    %166 = vmatprep.subr.mxu0 0.0
    %167 = vmatpush1.xpose.msra.mxu0 0.0
    %168 = vmatprep.subr.mxu0 0.0
    %169 = vmatpush1.xpose.msra.mxu0 0.0
    %170 = vmatprep.subr.mxu0 0.0
    %171 = vmatpush1.xpose.msra.mxu0 0.0
    %172 = vmatprep.subr.mxu0 0.0
    %173 = vmatpush1.xpose.msra.mxu0 0.0
    %174 = vmatprep.subr.mxu0 0.0
    %175 = vmatpush1.xpose.msra.mxu0 0.0
    %176 = vmatprep.subr.mxu0 0.0
    %177 = vmatpush1.xpose.msra.mxu0 0.0
    %178 = vmatprep.mubr.f32.mxu0 0.0
    %179 = vmatmul.mubr.f32.gmra.mrb[0].mxu0 %v88
    %v180 = vpop.f32.mrb[0].mxu0
    %v181 = vadd.f32 %v49, %v180
    %v182 = vpop.f32.mrb[0].mxu0
    %183 = vmatprep.mubr.f32.mxu0 0.0
    %184 = vmatmul.mubr.f32.gmra.mrb[0].mxu0 %v91
    %v185 = vpop.f32.mrb[0].mxu0
    %v186 = vadd.f32 %v54, %v185
    %v187 = vpop.f32.mrb[0].mxu0
    %188 = vmatprep.mubr.f32.mxu0 0.0
    %189 = vmatmul.mubr.f32.gmra.mrb[0].mxu0 %v94
    %v190 = vpop.f32.mrb[0].mxu0
    %v191 = vadd.f32 %v59, %v190
    %v192 = vpop.f32.mrb[0].mxu0
    %193 = vmatprep.mubr.f32.mxu0 0.0
    %194 = vmatmul.mubr.f32.gmra.mrb[0].mxu0 %v97
    %v195 = vpop.f32.mrb[0].mxu0
    %v196 = vadd.f32 %v64, %v195
    %v197 = vpop.f32.mrb[0].mxu0
    %198 = vmatprep.mubr.f32.mxu0 0.0
    %199 = vmatmul.mubr.f32.gmra.mrb[0].mxu0 %v100
    %v200 = vpop.f32.mrb[0].mxu0
    %v201 = vadd.f32 %v69, %v200
    %v202 = vpop.f32.mrb[0].mxu0
    %203 = vmatprep.mubr.f32.mxu0 0.0
    %204 = vmatmul.mubr.f32.gmra.mrb[0].mxu0 %v103
    %v205 = vpop.f32.mrb[0].mxu0
    %v206 = vadd.f32 %v74, %v205
    %v207 = vpop.f32.mrb[0].mxu0
    %208 = vmatprep.mubr.f32.mxu0 0.0
    %209 = vmatmul.mubr.f32.gmra.mrb[0].mxu0 %v106
    %v210 = vpop.f32.mrb[0].mxu0
    %v211 = vadd.f32 %v79, %v210
    %v212 = vpop.f32.mrb[0].mxu0
    %213 = vmatprep.mubr.f32.mxu0 0.0
    %214 = vmatmul.mubr.f32.gmra.mrb[0].mxu0 %v109
    %v215 = vpop.f32.mrb[0].mxu0
    %v216 = vadd.f32 %v84, %v215
    %v217 = vpop.f32.mrb[0].mxu0
    %218 = vdwg.mxu0
    %v219 = vmul.f32 %v181, 0.5
    %v220 = vmul.f32 %v186, 0.5
    %v221 = vmul.f32 %v191, 0.5
    %v222 = vmul.f32 %v196, 0.5
    %v223 = vmul.f32 %v201, 0.5
    %v224 = vmul.f32 %v206, 0.5
    %v225 = vmul.f32 %v211, 0.5
    %v226 = vmul.f32 %v216, 0.5
    %v227 = vtanh.pop %v219
    %v228 = vtanh.pop %v220
    %v229 = vtanh.pop %v221
    %v230 = vtanh.pop %v222
    %v231 = vtanh.pop %v223
    %v232 = vtanh.pop %v224
    %v233 = vtanh.pop %v225
    %v234 = vtanh.pop %v226
    %v235 = vmul.f32 %v227, 0.5
    %v236 = vmul.f32 %v228, 0.5
    %v237 = vmul.f32 %v229, 0.5
    %v238 = vmul.f32 %v230, 0.5
    %v239 = vmul.f32 %v231, 0.5
    %v240 = vmul.f32 %v232, 0.5
    %v241 = vmul.f32 %v233, 0.5
    %v242 = vmul.f32 %v234, 0.5
    %v243 = vadd.f32 %v235, 0.5
    %v244 = vadd.f32 %v236, 0.5
    %v245 = vadd.f32 %v237, 0.5
    %v246 = vadd.f32 %v238, 0.5
    %v247 = vadd.f32 %v239, 0.5
    %v248 = vadd.f32 %v240, 0.5
    %v249 = vadd.f32 %v241, 0.5
    %v250 = vadd.f32 %v242, 0.5
    %v251 = vld [vmem:[%s3] sm:$0xff]
    %v252 = vld [vmem:[%s3 + $0x8] sm:$0xff]
    %v253 = vld [vmem:[%s3 + $0x10] sm:$0xff]
    %v254 = vld [vmem:[%s3 + $0x18] sm:$0xff]
    %v255 = vld [vmem:[%s4] sm:$0xff]
    %v256 = vld [vmem:[%s4 + $0x8] sm:$0xff]
    %v257 = vld [vmem:[%s4 + $0x10] sm:$0xff]
    %v258 = vld [vmem:[%s4 + $0x18] sm:$0xff]
    %260 = vset.pattern.permute.xlu0 0
    %261 = vperm.xlu0 %260, %v255
    %v262 = vpop.permute.xlu0 %261
    %265 = vset.pattern.permute.xlu0 0
    %266 = vperm.xlu0 %265, %v256
    %v267 = vpop.permute.xlu0 %266
    %270 = vset.pattern.permute.xlu0 0
    %271 = vperm.xlu0 %270, %v257
    %v272 = vpop.permute.xlu0 %271
    %275 = vset.pattern.permute.xlu0 0
    %276 = vperm.xlu0 %275, %v258
    %v277 = vpop.permute.xlu0 %276
    %vm279 = vcmask 523264
    %v281 = vsel %vm279, %v251, 0
    %v284 = vsel %vm279, %v252, 0
    %v287 = vsel %vm279, %v253, 0
    %v290 = vsel %vm279, %v254, 0
    %292 = vmatprep.subr.mxu0 0.0
    %293 = vmatpush1.msra.mxu0 %v243
    %294 = vmatprep.subr.mxu0 0.0
    %295 = vmatpush1.msra.mxu0 %v244
    %296 = vmatprep.subr.mxu0 0.0
    %297 = vmatpush1.msra.mxu0 %v245
    %298 = vmatprep.subr.mxu0 0.0
    %299 = vmatpush1.msra.mxu0 %v246
    %300 = vmatprep.subr.mxu0 0.0
    %301 = vmatpush1.msra.mxu0 %v247
    %302 = vmatprep.subr.mxu0 0.0
    %303 = vmatpush1.msra.mxu0 %v248
    %304 = vmatprep.subr.mxu0 0.0
    %305 = vmatpush1.msra.mxu0 %v249
    %306 = vmatprep.subr.mxu0 0.0
    %307 = vmatpush1.msra.mxu0 %v250
    %308 = vmatprep.subr.mxu0 0.0
    %309 = vmatpush1.msra.mxu0 0.0
    %310 = vmatprep.subr.mxu0 0.0
    %311 = vmatpush1.msra.mxu0 0.0
    %312 = vmatprep.subr.mxu0 0.0
    %313 = vmatpush1.msra.mxu0 0.0
    %314 = vmatprep.subr.mxu0 0.0
    %315 = vmatpush1.msra.mxu0 0.0
    %316 = vmatprep.subr.mxu0 0.0
    %317 = vmatpush1.msra.mxu0 0.0
    %318 = vmatprep.subr.mxu0 0.0
    %319 = vmatpush1.msra.mxu0 0.0
    %320 = vmatprep.subr.mxu0 0.0
    %321 = vmatpush1.msra.mxu0 0.0
    %322 = vmatprep.subr.mxu0 0.0
    %323 = vmatpush1.msra.mxu0 0.0
    %324 = vmatprep.subr.mxu0 0.0
    %325 = vmatpush1.msra.mxu0 0.0
    %326 = vmatprep.subr.mxu0 0.0
    %327 = vmatpush1.msra.mxu0 0.0
    %328 = vmatprep.subr.mxu0 0.0
    %329 = vmatpush1.msra.mxu0 0.0
    %330 = vmatprep.subr.mxu0 0.0
    %331 = vmatpush1.msra.mxu0 0.0
    %332 = vmatprep.subr.mxu0 0.0
    %333 = vmatpush1.msra.mxu0 0.0
    %334 = vmatprep.subr.mxu0 0.0
    %335 = vmatpush1.msra.mxu0 0.0
    %336 = vmatprep.subr.mxu0 0.0
    %337 = vmatpush1.msra.mxu0 0.0
    %338 = vmatprep.subr.mxu0 0.0
    %339 = vmatpush1.msra.mxu0 0.0
    %340 = vmatprep.subr.mxu0 0.0
    %341 = vmatpush1.msra.mxu0 0.0
    %342 = vmatprep.subr.mxu0 0.0
    %343 = vmatpush1.msra.mxu0 0.0
    %344 = vmatprep.subr.mxu0 0.0
    %345 = vmatpush1.msra.mxu0 0.0
    %346 = vmatprep.subr.mxu0 0.0
    %347 = vmatpush1.msra.mxu0 0.0
    %348 = vmatprep.subr.mxu0 0.0
    %349 = vmatpush1.msra.mxu0 0.0
    %350 = vmatprep.subr.mxu0 0.0
    %351 = vmatpush1.msra.mxu0 0.0
    %352 = vmatprep.subr.mxu0 0.0
    %353 = vmatpush1.msra.mxu0 0.0
    %354 = vmatprep.subr.mxu0 0.0
    %355 = vmatpush1.msra.mxu0 0.0
    %356 = vmatprep.mubr.f32.mxu0 0.0
    %357 = vmatmul.mubr.f32.gmra.mrb[0].mxu0 %v281
    %v358 = vpop.f32.mrb[0].mxu0
    %v359 = vadd.f32 %v262, %v358
    %v360 = vpop.f32.mrb[0].mxu0
    %361 = vmatprep.mubr.f32.mxu0 0.0
    %362 = vmatmul.mubr.f32.gmra.mrb[0].mxu0 %v284
    %v363 = vpop.f32.mrb[0].mxu0
    %v364 = vadd.f32 %v267, %v363
    %v365 = vpop.f32.mrb[0].mxu0
    %366 = vmatprep.mubr.f32.mxu0 0.0
    %367 = vmatmul.mubr.f32.gmra.mrb[0].mxu0 %v287
    %v368 = vpop.f32.mrb[0].mxu0
    %v369 = vadd.f32 %v272, %v368
    %v370 = vpop.f32.mrb[0].mxu0
    %371 = vmatprep.mubr.f32.mxu0 0.0
    %372 = vmatmul.mubr.f32.gmra.mrb[0].mxu0 %v290
    %v373 = vpop.f32.mrb[0].mxu0
    %v374 = vadd.f32 %v277, %v373
    %v375 = vpop.f32.mrb[0].mxu0
    %376 = vdwg.mxu0
    %v377 = vmul.f32 %v359, 0.5
    %v378 = vmul.f32 %v364, 0.5
    %v379 = vmul.f32 %v369, 0.5
    %v380 = vmul.f32 %v374, 0.5
    %v381 = vtanh.pop %v377
    %v382 = vtanh.pop %v378
    %v383 = vtanh.pop %v379
    %v384 = vtanh.pop %v380
    %v385 = vmul.f32 %v381, 0.5
    %v386 = vmul.f32 %v382, 0.5
    %v387 = vmul.f32 %v383, 0.5
    %v388 = vmul.f32 %v384, 0.5
    %v389 = vadd.f32 %v385, 0.5
    %v390 = vadd.f32 %v386, 0.5
    %v391 = vadd.f32 %v387, 0.5
    %v392 = vadd.f32 %v388, 0.5
    %v393 = vld [vmem:[%s5] sm:$0x1]
    %v394 = vld [vmem:[#allocation2] sm:$0x1]
    %396 = vset.pattern.permute.xlu0 0
    %397 = vperm.xlu0 %396, %v394
    %v398 = vpop.permute.xlu0 %397
    %v400 = vlaneseq
    %v401 = vshrl.u32 %v400, 7
    %v402 = vsub.s32 0, %v401
    %v403 = vrot.slane %v398, %v402
    %vm404 = vcmask 261120
    %v406 = vsel %vm404, %v393, 0
    %408 = vmatprep.subr.mxu0 0.0
    %409 = vmatpush1.msra.mxu0 %v389
    %410 = vmatprep.subr.mxu0 0.0
    %411 = vmatpush1.msra.mxu0 %v390
    %412 = vmatprep.subr.mxu0 0.0
    %413 = vmatpush1.msra.mxu0 %v391
    %414 = vmatprep.subr.mxu0 0.0
    %415 = vmatpush1.msra.mxu0 %v392
    %416 = vmatprep.subr.mxu0 0.0
    %417 = vmatpush1.msra.mxu0 0.0
    %418 = vmatprep.subr.mxu0 0.0
    %419 = vmatpush1.msra.mxu0 0.0
    %420 = vmatprep.subr.mxu0 0.0
    %421 = vmatpush1.msra.mxu0 0.0
    %422 = vmatprep.subr.mxu0 0.0
    %423 = vmatpush1.msra.mxu0 0.0
    %424 = vmatprep.subr.mxu0 0.0
    %425 = vmatpush1.msra.mxu0 0.0
    %426 = vmatprep.subr.mxu0 0.0
    %427 = vmatpush1.msra.mxu0 0.0
    %428 = vmatprep.subr.mxu0 0.0
    %429 = vmatpush1.msra.mxu0 0.0
    %430 = vmatprep.subr.mxu0 0.0
    %431 = vmatpush1.msra.mxu0 0.0
    %432 = vmatprep.subr.mxu0 0.0
    %433 = vmatpush1.msra.mxu0 0.0
    %434 = vmatprep.subr.mxu0 0.0
    %435 = vmatpush1.msra.mxu0 0.0
    %436 = vmatprep.subr.mxu0 0.0
    %437 = vmatpush1.msra.mxu0 0.0
    %438 = vmatprep.subr.mxu0 0.0
    %439 = vmatpush1.msra.mxu0 0.0
    %440 = vmatprep.subr.mxu0 0.0
    %441 = vmatpush1.msra.mxu0 0.0
    %442 = vmatprep.subr.mxu0 0.0
    %443 = vmatpush1.msra.mxu0 0.0
    %444 = vmatprep.subr.mxu0 0.0
    %445 = vmatpush1.msra.mxu0 0.0
    %446 = vmatprep.subr.mxu0 0.0
    %447 = vmatpush1.msra.mxu0 0.0
    %448 = vmatprep.subr.mxu0 0.0
    %449 = vmatpush1.msra.mxu0 0.0
    %450 = vmatprep.subr.mxu0 0.0
    %451 = vmatpush1.msra.mxu0 0.0
    %452 = vmatprep.subr.mxu0 0.0
    %453 = vmatpush1.msra.mxu0 0.0
    %454 = vmatprep.subr.mxu0 0.0
    %455 = vmatpush1.msra.mxu0 0.0
    %456 = vmatprep.subr.mxu0 0.0
    %457 = vmatpush1.msra.mxu0 0.0
    %458 = vmatprep.subr.mxu0 0.0
    %459 = vmatpush1.msra.mxu0 0.0
    %460 = vmatprep.subr.mxu0 0.0
    %461 = vmatpush1.msra.mxu0 0.0
    %462 = vmatprep.subr.mxu0 0.0
    %463 = vmatpush1.msra.mxu0 0.0
    %464 = vmatprep.subr.mxu0 0.0
    %465 = vmatpush1.msra.mxu0 0.0
    %466 = vmatprep.subr.mxu0 0.0
    %467 = vmatpush1.msra.mxu0 0.0
    %468 = vmatprep.subr.mxu0 0.0
    %469 = vmatpush1.msra.mxu0 0.0
    %470 = vmatprep.subr.mxu0 0.0
    %471 = vmatpush1.msra.mxu0 0.0
    %472 = vmatprep.mubr.f32.mxu0 0.0
    %473 = vmatmul.mubr.f32.gmra.mrb[0].mxu0 %v406
    %v474 = vpop.f32.mrb[0].mxu0
    %v475 = vadd.f32 %v403, %v474
    %v476 = vpop.f32.mrb[0].mxu0
    %477 = vdwg.mxu0
    %v478 = vmul.f32 %v475, 0.5
    %v479 = vtanh.pop %v478
    %v480 = vmul.f32 %v479, 0.5
    %v481 = vadd.f32 %v480, 0.5
    %vm482 = vcmask 57344
    %483 = vst.msk [vmem:[#allocation3] sm:$0x1] %vm482, %v481
    // Predicated region
    $region30: #{net_forward.1} parent=1 // pred_check
      _
    $region31: #{net_forward.1} parent=1 // pred_check_branch
      %485 = sbr.rel (0) target = $region33
    $region32: #{net_forward.1} parent=1 // pred_region
      %s487 = ssub.s32 16, 16
      %488 = vsyncadd [#allocation4], %s487
      %s490 = sshll.u32 [#allocation3], 4
      %s491 = int_to_ptr.vmem [resolvable:$true] %s490
      %493 = dma.vmem_to_hbm [thread:$0]  %s491, 16, %s7, [#allocation4]
    $region33: #{net_forward.1} parent=1 // pred_fallthru
      _
    // Predicated region
    $region34: #{net_forward.1} parent=1 // pred_check
      _
    $region35: #{net_forward.1} parent=1 // pred_check_branch
      %495 = sbr.rel (0) target = $region37
    $region36: #{net_forward.1} parent=1 // pred_region
      %496 = dma.done [#allocation4], 16
    $region37: #{net_forward.1} parent=1 // pred_fallthru
      _
    %497 = vsyncpa [#allocation4], 1

</llo_original>
